<compile_context>
chip_gen: v5e
topology: v5e:2x2
jax: 0.10.0
libtpu: 0.0.40
codegen_flags: <defaults>
</compile_context>

<pallas_src>
import jax
import jax.numpy as jnp
from jax import lax
from jax.experimental import pallas as pl
from jax.experimental.pallas import tpu as pltpu

EPS = 1e-5  # PyTorch nn.LayerNorm default


def _cnn_layernorm_kernel(x_ref, g_ref, b_ref, o_ref):
    # x_ref: (n_tile, F, t_tile) -- F on sublanes, time on lanes.
    # g_ref / b_ref: (1, F, 1)
    x = x_ref[...].astype(jnp.float32)
    f = x.shape[1]
    inv_f = 1.0 / f

    # One-pass statistics along the feature (sublane) axis.
    s1 = jnp.sum(x, axis=1, keepdims=True)       # (n_tile, 1, t_tile)
    s2 = jnp.sum(x * x, axis=1, keepdims=True)   # (n_tile, 1, t_tile)
    mean = s1 * inv_f
    var = jnp.maximum(s2 * inv_f - mean * mean, 0.0)  # biased var, clamped >= 0
    inv = lax.rsqrt(var + EPS)                        # EUP slot

    g = g_ref[...].astype(jnp.float32)           # (1, F, 1) -> broadcasts over lanes
    b = b_ref[...].astype(jnp.float32)
    y = (x - mean) * inv * g + b
    o_ref[...] = y.astype(o_ref.dtype)


def cnn_layer_norm(x, gamma, beta, *, n_tile=None, t_tile=None):
    """x: (B, C, F, T) NCHW; gamma/beta: (F,). Returns same shape/dtype as x."""
    B, C, F, T = x.shape
    N = B * C
    # Leading-dim reshape only (no data movement in HBM).
    x3 = x.reshape(N, F, T)
    g3 = gamma.reshape(1, F, 1)
    b3 = beta.reshape(1, F, 1)

    # ---- time tile: lane-dense (multiple of 128) when possible -------------
    if t_tile is None:
        if T <= 128:
            t_tile = T                      # full-extent block (small time dim)
        elif T % 128 == 0:
            t_tile = min(T, 512)
        else:
            t_tile = 128                    # partial tail handled by Pallas
    grid_t = pl.cdiv(T, t_tile)

    # ---- row tile: target ~1 MiB input tile, snapped to a divisor of N -----
    if n_tile is None:
        bytes_per_row = F * t_tile * x.dtype.itemsize
        n_tile = max(1, min(N, (1 << 20) // max(1, bytes_per_row)))
    n_tile = max(1, min(n_tile, N))
    while N % n_tile:
        n_tile -= 1
    grid_n = N // n_tile

    out3 = pl.pallas_call(
        _cnn_layernorm_kernel,
        out_shape=jax.ShapeDtypeStruct((N, F, T), x.dtype),
        grid_spec=pl.GridSpec(
            grid=(grid_n, grid_t),
            in_specs=[
                pl.BlockSpec((n_tile, F, t_tile), lambda n, t: (n, 0, t)),
                pl.BlockSpec((1, F, 1), lambda n, t: (0, 0, 0)),
                pl.BlockSpec((1, F, 1), lambda n, t: (0, 0, 0)),
            ],
            out_specs=pl.BlockSpec((n_tile, F, t_tile), lambda n, t: (n, 0, t)),
        ),
        compiler_params=pltpu.CompilerParams(
            dimension_semantics=("parallel", "parallel"),
            vmem_limit_bytes=32 * 1024 * 1024,
        ),
    )(x3, g3, b3)

    return out3.reshape(B, C, F, T)


def _reference(x, gamma, beta):
    # pure-JAX reference of the PyTorch forward (two-pass variance)
    xt = jnp.transpose(x, (0, 1, 3, 2)).astype(jnp.float32)
    mean = jnp.mean(xt, axis=-1, keepdims=True)
    var = jnp.mean((xt - mean) ** 2, axis=-1, keepdims=True)
    y = (xt - mean) / jnp.sqrt(var + EPS) * gamma + beta
    return jnp.transpose(y, (0, 1, 3, 2)).astype(x.dtype)


if __name__ == "__main__":
    key = jax.random.PRNGKey(0)

    def run_case(B, C, F, T, kcase, **kw):
        kx, kg, kb = jax.random.split(kcase, 3)
        x = jax.random.normal(kx, (B, C, F, T), dtype=jnp.float32)
        gamma = 1.0 + 0.1 * jax.random.normal(kg, (F,), dtype=jnp.float32)
        beta = 0.1 * jax.random.normal(kb, (F,), dtype=jnp.float32)
        out = jax.block_until_ready(cnn_layer_norm(x, gamma, beta, **kw))
        ref = _reference(x, gamma, beta)
        assert out.shape == x.shape and out.dtype == x.dtype
        err = float(jnp.max(jnp.abs(out.astype(jnp.float32) - ref.astype(jnp.float32))))
        assert jnp.allclose(out, ref, atol=1e-4, rtol=1e-4), err

    k1, k2, k3 = jax.random.split(key, 3)
    run_case(2, 4, 16, 256, k1)               # lane-dense, evenly dividing
    run_case(2, 8, 64, 300, k2)               # partial tail along time (cdiv)
    run_case(2, 8, 64, 384, k3, n_tile=4)     # multiple grid steps on the row axis

    print("KERNEL_OK")
</pallas_src>

<mosaic_0001>
module attributes {stable_mosaic.version = 11 : i64} {
  func.func @_cnn_layernorm_kernel(%arg0: i32, %arg1: i32, %arg2: memref<8x16x256xf32, #tpu.memory_space<vmem>>, %arg3: memref<1x16x1xf32, #tpu.memory_space<vmem>>, %arg4: memref<1x16x1xf32, #tpu.memory_space<vmem>>, %arg5: memref<8x16x256xf32, #tpu.memory_space<vmem>>) attributes {dimension_semantics = [#tpu.dimension_semantics<parallel>, #tpu.dimension_semantics<parallel>], iteration_bounds = array<i64: 1, 1>, scalar_prefetch = 0 : i64, scratch_operands = 0 : i64, tpu.core_type = #tpu.core_type<tc>, window_params = [{transform_indices = @transform_0, window_bounds = array<i64: 8, 16, 256>}, {pipeline_mode = #tpu.pipeline_mode<synchronous>, transform_indices = @transform_1, window_bounds = array<i64: 1, 16, 1>}, {pipeline_mode = #tpu.pipeline_mode<synchronous>, transform_indices = @transform_2, window_bounds = array<i64: 1, 16, 1>}, {transform_indices = @transform_3, window_bounds = array<i64: 8, 16, 256>}]} {
    %c0 = arith.constant 0 : index
    %c0_0 = arith.constant 0 : index
    %c0_1 = arith.constant 0 : index
    %0 = vector.load %arg2[%c0, %c0_0, %c0_1] : memref<8x16x256xf32, #tpu.memory_space<vmem>>, vector<8x16x256xf32>
    %cst = arith.constant dense<0.000000e+00> : vector<8x256xf32>
    %1 = vector.multi_reduction <add>, %0, %cst [1] : vector<8x16x256xf32> to vector<8x256xf32>
    %2 = vector.shape_cast %1 : vector<8x256xf32> to vector<8x1x256xf32>
    %3 = arith.mulf %0, %0 : vector<8x16x256xf32>
    %cst_2 = arith.constant dense<0.000000e+00> : vector<8x256xf32>
    %4 = vector.multi_reduction <add>, %3, %cst_2 [1] : vector<8x16x256xf32> to vector<8x256xf32>
    %5 = vector.shape_cast %4 : vector<8x256xf32> to vector<8x1x256xf32>
    %cst_3 = arith.constant 6.250000e-02 : f32
    %6 = vector.broadcast %cst_3 : f32 to vector<8x1x256xf32>
    %7 = arith.mulf %2, %6 : vector<8x1x256xf32>
    %cst_4 = arith.constant 6.250000e-02 : f32
    %8 = vector.broadcast %cst_4 : f32 to vector<8x1x256xf32>
    %9 = arith.mulf %5, %8 : vector<8x1x256xf32>
    %10 = arith.mulf %7, %7 : vector<8x1x256xf32>
    %11 = arith.subf %9, %10 : vector<8x1x256xf32>
    %cst_5 = arith.constant 0.000000e+00 : f32
    %12 = vector.broadcast %cst_5 : f32 to vector<8x1x256xf32>
    %13 = arith.maximumf %11, %12 : vector<8x1x256xf32>
    %cst_6 = arith.constant 9.99999974E-6 : f32
    %14 = vector.broadcast %cst_6 : f32 to vector<8x1x256xf32>
    %15 = arith.addf %13, %14 : vector<8x1x256xf32>
    %16 = math.rsqrt %15 : vector<8x1x256xf32>
    %c0_7 = arith.constant 0 : index
    %c0_8 = arith.constant 0 : index
    %c0_9 = arith.constant 0 : index
    %17 = vector.load %arg3[%c0_7, %c0_8, %c0_9] : memref<1x16x1xf32, #tpu.memory_space<vmem>>, vector<1x16x1xf32>
    %c0_10 = arith.constant 0 : index
    %c0_11 = arith.constant 0 : index
    %c0_12 = arith.constant 0 : index
    %18 = vector.load %arg4[%c0_10, %c0_11, %c0_12] : memref<1x16x1xf32, #tpu.memory_space<vmem>>, vector<1x16x1xf32>
    %19 = vector.broadcast %7 : vector<8x1x256xf32> to vector<8x16x256xf32>
    %20 = arith.subf %0, %19 : vector<8x16x256xf32>
    %21 = vector.broadcast %16 : vector<8x1x256xf32> to vector<8x16x256xf32>
    %22 = arith.mulf %20, %21 : vector<8x16x256xf32>
    %23 = vector.broadcast %17 : vector<1x16x1xf32> to vector<8x16x256xf32>
    %24 = arith.mulf %22, %23 : vector<8x16x256xf32>
    %25 = vector.broadcast %18 : vector<1x16x1xf32> to vector<8x16x256xf32>
    %26 = arith.addf %24, %25 : vector<8x16x256xf32>
    %c0_13 = arith.constant 0 : index
    %c0_14 = arith.constant 0 : index
    %c0_15 = arith.constant 0 : index
    %27 = vector.load %arg5[%c0_13, %c0_14, %c0_15] : memref<8x16x256xf32, #tpu.memory_space<vmem>>, vector<8x16x256xf32>
    tpu.vector_store %arg5[%c0_13, %c0_14, %c0_15], %26 {strides = array<i32>} : memref<8x16x256xf32, #tpu.memory_space<vmem>>, vector<8x16x256xf32>,
    return
  }
  func.func @transform_0(%arg0: i32, %arg1: i32) -> (i32, i32, i32) {
    %c0_i32 = arith.constant 0 : i32
    %c0_i32_0 = arith.constant 0 : i32
    return %arg0, %c0_i32, %arg1 : i32, i32, i32
  }
  func.func @transform_1(%arg0: i32, %arg1: i32) -> (i32, i32, i32) {
    %c0_i32 = arith.constant 0 : i32
    %c0_i32_0 = arith.constant 0 : i32
    %c0_i32_1 = arith.constant 0 : i32
    %c0_i32_2 = arith.constant 0 : i32
    return %c0_i32, %c0_i32_0, %c0_i32_1 : i32, i32, i32
  }
  func.func @transform_2(%arg0: i32, %arg1: i32) -> (i32, i32, i32) {
    %c0_i32 = arith.constant 0 : i32
    %c0_i32_0 = arith.constant 0 : i32
    %c0_i32_1 = arith.constant 0 : i32
    %c0_i32_2 = arith.constant 0 : i32
    return %c0_i32, %c0_i32_0, %c0_i32_1 : i32, i32, i32
  }
  func.func @transform_3(%arg0: i32, %arg1: i32) -> (i32, i32, i32) {
    %c0_i32 = arith.constant 0 : i32
    %c0_i32_0 = arith.constant 0 : i32
    return %arg0, %c0_i32, %arg1 : i32, i32, i32
  }
}

</mosaic_0001>

<llo_original>
// kernel: tpu_custom_call.1
$region0: #{tpu_custom_call.1}
  #allocation0 [shape = 'u32[]', space=smem, size = 0x4, offset = 0x4, fixed_abs, tag = 'smem constant byte address 0x4 - core index']
  #allocation1 [shape = 'u32[72,128]{1,0:T(1,128)}', space=vmem, size = 0x9000, scoped, tag = 'internal scratch']
  %s0 = inlined_call_operand.hbm [shape: f32[8,16,256], index: 0, kind: input, shape index: {}]
  %s1 = inlined_call_operand.vmem [shape: f32[1,16,1], index: 1, kind: input, shape index: {}]
  %s2 = inlined_call_operand.vmem [shape: f32[1,16,1], index: 2, kind: input, shape index: {}]
  %s3 = inlined_call_operand.hbm [shape: f32[8,16,256], index: 3, kind: output, shape index: {}]
  %s4 = sld [smem:[#allocation0]]
  $region26: #{tpu_custom_call.1} parent=0
    _
  %s6 = ssub.s32 1, %s4
  %s7 = scalar_select 0, %s6, %s4
  $region1: #{tpu_custom_call.1} parent=0
    #allocation2 [shape = 'u8[131072]{0}', space=vmem, size = 0x20000, scoped, tag = 'input window, operand 0, single buffered']
    #allocation3 [shape = 's32[1]{0}', space=sflag, size = 0x4, scoped, tag = 'scoped memory for tpu_custom_call.1']
    #allocation4 [shape = 's32[1]{0}', space=sflag, size = 0x4, scoped, tag = 'scoped memory for tpu_custom_call.1']
    #allocation5 [shape = 'u8[131072]{0}', space=vmem, size = 0x20000, scoped, tag = 'output window, operand 0, single buffered']
    %8 = vsyncpa [#allocation3], 0
    %9 = vsyncpa [#allocation4], 0
    // Predicated region
    $region2: #{tpu_custom_call.1} parent=1 // pred_check
      _
    $region3: #{tpu_custom_call.1} parent=1 // pred_check_branch
      %11 = sbr.rel (0) target = $region5
    $region4: #{tpu_custom_call.1} parent=1 // pred_region
      %13 = vsyncadd [#allocation3], 0
      %s14 = sshll.u32 %s0, 4
      %s15 = int_to_ptr.hbm [resolvable:$true] %s14
      %s16 = sshll.u32 [#allocation2], 4
      %s17 = int_to_ptr.vmem [resolvable:$true] %s16
      %22 = dma.hbm_to_vmem [thread:$0]  %s15, 4096, %s17, [#allocation3], 256, 256, 16
    $region5: #{tpu_custom_call.1} parent=1 // pred_fallthru
      _
    // Predicated region
    $region6: #{tpu_custom_call.1} parent=1 // pred_check
      _
    $region7: #{tpu_custom_call.1} parent=1 // pred_check_branch
      %24 = sbr.rel (0) target = $region9
    $region8: #{tpu_custom_call.1} parent=1 // pred_region
      _
    $region9: #{tpu_custom_call.1} parent=1 // pred_fallthru
      _
    // Predicated region
    $region10: #{tpu_custom_call.1} parent=1 // pred_check
      _
    $region11: #{tpu_custom_call.1} parent=1 // pred_check_branch
      %26 = sbr.rel (0) target = $region13
    $region12: #{tpu_custom_call.1} parent=1 // pred_region
      _
    $region13: #{tpu_custom_call.1} parent=1 // pred_fallthru
      _
    // Predicated region
    $region14: #{tpu_custom_call.1} parent=1 // pred_check
      _
    $region15: #{tpu_custom_call.1} parent=1 // pred_check_branch
      %28 = sbr.rel (0) target = $region17
    $region16: #{tpu_custom_call.1} parent=1 // pred_region
      %30 = dma.done [#allocation3], 4096
    $region17: #{tpu_custom_call.1} parent=1 // pred_fallthru
      _
    %v31 = vld [vmem:[#allocation2] sm:$0xff]
    %v32 = vld [vmem:[#allocation2 + $0x8] sm:$0xff]
    %v33 = vld [vmem:[#allocation2 + $0x10] sm:$0xff]
    %v34 = vld [vmem:[#allocation2 + $0x18] sm:$0xff]
    %v35 = vld [vmem:[#allocation2 + $0x20] sm:$0xff]
    %v36 = vld [vmem:[#allocation2 + $0x28] sm:$0xff]
    %v37 = vld [vmem:[#allocation2 + $0x30] sm:$0xff]
    %v38 = vld [vmem:[#allocation2 + $0x38] sm:$0xff]
    %v39 = vld [vmem:[#allocation2 + $0x40] sm:$0xff]
    %v40 = vld [vmem:[#allocation2 + $0x48] sm:$0xff]
    %v41 = vld [vmem:[#allocation2 + $0x50] sm:$0xff]
    %v42 = vld [vmem:[#allocation2 + $0x58] sm:$0xff]
    %v43 = vld [vmem:[#allocation2 + $0x60] sm:$0xff]
    %v44 = vld [vmem:[#allocation2 + $0x68] sm:$0xff]
    %v45 = vld [vmem:[#allocation2 + $0x70] sm:$0xff]
    %v46 = vld [vmem:[#allocation2 + $0x78] sm:$0xff]
    %v47 = vld [vmem:[#allocation2 + $0x80] sm:$0xff]
    %v48 = vld [vmem:[#allocation2 + $0x88] sm:$0xff]
    %v49 = vld [vmem:[#allocation2 + $0x90] sm:$0xff]
    %v50 = vld [vmem:[#allocation2 + $0x98] sm:$0xff]
    %v51 = vld [vmem:[#allocation2 + $0xa0] sm:$0xff]
    %v52 = vld [vmem:[#allocation2 + $0xa8] sm:$0xff]
    %v53 = vld [vmem:[#allocation2 + $0xb0] sm:$0xff]
    %v54 = vld [vmem:[#allocation2 + $0xb8] sm:$0xff]
    %v55 = vld [vmem:[#allocation2 + $0xc0] sm:$0xff]
    %v56 = vld [vmem:[#allocation2 + $0xc8] sm:$0xff]
    %v57 = vld [vmem:[#allocation2 + $0xd0] sm:$0xff]
    %v58 = vld [vmem:[#allocation2 + $0xd8] sm:$0xff]
    %v59 = vld [vmem:[#allocation2 + $0xe0] sm:$0xff]
    %v60 = vld [vmem:[#allocation2 + $0xe8] sm:$0xff]
    %v61 = vld [vmem:[#allocation2 + $0xf0] sm:$0xff]
    %v62 = vld [vmem:[#allocation2 + $0xf8] sm:$0xff]
    %v63 = vadd.f32 %v31, %v33
    %v64 = vrot.slane %v63, 4
    %v65 = vadd.f32 %v63, %v64
    %v66 = vrot.slane %v65, 2
    %v67 = vadd.f32 %v65, %v66
    %v68 = vrot.slane %v67, 1
    %v69 = vadd.f32 %v67, %v68
    %v70 = vadd.f32 %v32, %v34
    %v71 = vrot.slane %v70, 4
    %v72 = vadd.f32 %v70, %v71
    %v73 = vrot.slane %v72, 2
    %v74 = vadd.f32 %v72, %v73
    %v75 = vrot.slane %v74, 1
    %v76 = vadd.f32 %v74, %v75
    %v77 = vadd.f32 %v35, %v37
    %v78 = vrot.slane %v77, 4
    %v79 = vadd.f32 %v77, %v78
    %v80 = vrot.slane %v79, 2
    %v81 = vadd.f32 %v79, %v80
    %v82 = vrot.slane %v81, 1
    %v83 = vadd.f32 %v81, %v82
    %v84 = vadd.f32 %v36, %v38
    %v85 = vrot.slane %v84, 4
    %v86 = vadd.f32 %v84, %v85
    %v87 = vrot.slane %v86, 2
    %v88 = vadd.f32 %v86, %v87
    %v89 = vrot.slane %v88, 1
    %v90 = vadd.f32 %v88, %v89
    %v91 = vadd.f32 %v39, %v41
    %v92 = vrot.slane %v91, 4
    %v93 = vadd.f32 %v91, %v92
    %v94 = vrot.slane %v93, 2
    %v95 = vadd.f32 %v93, %v94
    %v96 = vrot.slane %v95, 1
    %v97 = vadd.f32 %v95, %v96
    %v98 = vadd.f32 %v40, %v42
    %v99 = vrot.slane %v98, 4
    %v100 = vadd.f32 %v98, %v99
    %v101 = vrot.slane %v100, 2
    %v102 = vadd.f32 %v100, %v101
    %v103 = vrot.slane %v102, 1
    %v104 = vadd.f32 %v102, %v103
    %v105 = vadd.f32 %v43, %v45
    %v106 = vrot.slane %v105, 4
    %v107 = vadd.f32 %v105, %v106
    %v108 = vrot.slane %v107, 2
    %v109 = vadd.f32 %v107, %v108
    %v110 = vrot.slane %v109, 1
    %v111 = vadd.f32 %v109, %v110
    %v112 = vadd.f32 %v44, %v46
    %v113 = vrot.slane %v112, 4
    %v114 = vadd.f32 %v112, %v113
    %v115 = vrot.slane %v114, 2
    %v116 = vadd.f32 %v114, %v115
    %v117 = vrot.slane %v116, 1
    %v118 = vadd.f32 %v116, %v117
    %v119 = vadd.f32 %v47, %v49
    %v120 = vrot.slane %v119, 4
    %v121 = vadd.f32 %v119, %v120
    %v122 = vrot.slane %v121, 2
    %v123 = vadd.f32 %v121, %v122
    %v124 = vrot.slane %v123, 1
    %v125 = vadd.f32 %v123, %v124
    %v126 = vadd.f32 %v48, %v50
    %v127 = vrot.slane %v126, 4
    %v128 = vadd.f32 %v126, %v127
    %v129 = vrot.slane %v128, 2
    %v130 = vadd.f32 %v128, %v129
    %v131 = vrot.slane %v130, 1
    %v132 = vadd.f32 %v130, %v131
    %v133 = vadd.f32 %v51, %v53
    %v134 = vrot.slane %v133, 4
    %v135 = vadd.f32 %v133, %v134
    %v136 = vrot.slane %v135, 2
    %v137 = vadd.f32 %v135, %v136
    %v138 = vrot.slane %v137, 1
    %v139 = vadd.f32 %v137, %v138
    %v140 = vadd.f32 %v52, %v54
    %v141 = vrot.slane %v140, 4
    %v142 = vadd.f32 %v140, %v141
    %v143 = vrot.slane %v142, 2
    %v144 = vadd.f32 %v142, %v143
    %v145 = vrot.slane %v144, 1
    %v146 = vadd.f32 %v144, %v145
    %v147 = vadd.f32 %v55, %v57
    %v148 = vrot.slane %v147, 4
    %v149 = vadd.f32 %v147, %v148
    %v150 = vrot.slane %v149, 2
    %v151 = vadd.f32 %v149, %v150
    %v152 = vrot.slane %v151, 1
    %v153 = vadd.f32 %v151, %v152
    %v154 = vadd.f32 %v56, %v58
    %v155 = vrot.slane %v154, 4
    %v156 = vadd.f32 %v154, %v155
    %v157 = vrot.slane %v156, 2
    %v158 = vadd.f32 %v156, %v157
    %v159 = vrot.slane %v158, 1
    %v160 = vadd.f32 %v158, %v159
    %v161 = vadd.f32 %v59, %v61
    %v162 = vrot.slane %v161, 4
    %v163 = vadd.f32 %v161, %v162
    %v164 = vrot.slane %v163, 2
    %v165 = vadd.f32 %v163, %v164
    %v166 = vrot.slane %v165, 1
    %v167 = vadd.f32 %v165, %v166
    %v168 = vadd.f32 %v60, %v62
    %v169 = vrot.slane %v168, 4
    %v170 = vadd.f32 %v168, %v169
    %v171 = vrot.slane %v170, 2
    %v172 = vadd.f32 %v170, %v171
    %v173 = vrot.slane %v172, 1
    %v174 = vadd.f32 %v172, %v173
    %v175 = vmul.f32 %v31, %v31
    %v176 = vmul.f32 %v32, %v32
    %v177 = vmul.f32 %v33, %v33
    %v178 = vmul.f32 %v34, %v34
    %v179 = vmul.f32 %v35, %v35
    %v180 = vmul.f32 %v36, %v36
    %v181 = vmul.f32 %v37, %v37
    %v182 = vmul.f32 %v38, %v38
    %v183 = vmul.f32 %v39, %v39
    %v184 = vmul.f32 %v40, %v40
    %v185 = vmul.f32 %v41, %v41
    %v186 = vmul.f32 %v42, %v42
    %v187 = vmul.f32 %v43, %v43
    %v188 = vmul.f32 %v44, %v44
    %v189 = vmul.f32 %v45, %v45
    %v190 = vmul.f32 %v46, %v46
    %v191 = vmul.f32 %v47, %v47
    %v192 = vmul.f32 %v48, %v48
    %v193 = vmul.f32 %v49, %v49
    %v194 = vmul.f32 %v50, %v50
    %v195 = vmul.f32 %v51, %v51
    %v196 = vmul.f32 %v52, %v52
    %v197 = vmul.f32 %v53, %v53
    %v198 = vmul.f32 %v54, %v54
    %v199 = vmul.f32 %v55, %v55
    %v200 = vmul.f32 %v56, %v56
    %v201 = vmul.f32 %v57, %v57
    %v202 = vmul.f32 %v58, %v58
    %v203 = vmul.f32 %v59, %v59
    %v204 = vmul.f32 %v60, %v60
    %v205 = vmul.f32 %v61, %v61
    %v206 = vmul.f32 %v62, %v62
    %v207 = vadd.f32 %v175, %v177
    %v208 = vrot.slane %v207, 4
    %v209 = vadd.f32 %v207, %v208
    %v210 = vrot.slane %v209, 2
    %v211 = vadd.f32 %v209, %v210
    %v212 = vrot.slane %v211, 1
    %v213 = vadd.f32 %v211, %v212
    %v214 = vadd.f32 %v176, %v178
    %v215 = vrot.slane %v214, 4
    %v216 = vadd.f32 %v214, %v215
    %v217 = vrot.slane %v216, 2
    %v218 = vadd.f32 %v216, %v217
    %v219 = vrot.slane %v218, 1
    %v220 = vadd.f32 %v218, %v219
    %v221 = vadd.f32 %v179, %v181
    %v222 = vrot.slane %v221, 4
    %v223 = vadd.f32 %v221, %v222
    %v224 = vrot.slane %v223, 2
    %v225 = vadd.f32 %v223, %v224
    %v226 = vrot.slane %v225, 1
    %v227 = vadd.f32 %v225, %v226
    %v228 = vadd.f32 %v180, %v182
    %v229 = vrot.slane %v228, 4
    %v230 = vadd.f32 %v228, %v229
    %v231 = vrot.slane %v230, 2
    %v232 = vadd.f32 %v230, %v231
    %v233 = vrot.slane %v232, 1
    %v234 = vadd.f32 %v232, %v233
    %v235 = vadd.f32 %v183, %v185
    %v236 = vrot.slane %v235, 4
    %v237 = vadd.f32 %v235, %v236
    %v238 = vrot.slane %v237, 2
    %v239 = vadd.f32 %v237, %v238
    %v240 = vrot.slane %v239, 1
    %v241 = vadd.f32 %v239, %v240
    %v242 = vadd.f32 %v184, %v186
    %v243 = vrot.slane %v242, 4
    %v244 = vadd.f32 %v242, %v243
    %v245 = vrot.slane %v244, 2
    %v246 = vadd.f32 %v244, %v245
    %v247 = vrot.slane %v246, 1
    %v248 = vadd.f32 %v246, %v247
    %v249 = vadd.f32 %v187, %v189
    %v250 = vrot.slane %v249, 4
    %v251 = vadd.f32 %v249, %v250
    %v252 = vrot.slane %v251, 2
    %v253 = vadd.f32 %v251, %v252
    %v254 = vrot.slane %v253, 1
    %v255 = vadd.f32 %v253, %v254
    %v256 = vadd.f32 %v188, %v190
    %v257 = vrot.slane %v256, 4
    %v258 = vadd.f32 %v256, %v257
    %v259 = vrot.slane %v258, 2
    %v260 = vadd.f32 %v258, %v259
    %v261 = vrot.slane %v260, 1
    %v262 = vadd.f32 %v260, %v261
    %v263 = vadd.f32 %v191, %v193
    %v264 = vrot.slane %v263, 4
    %v265 = vadd.f32 %v263, %v264
    %v266 = vrot.slane %v265, 2
    %v267 = vadd.f32 %v265, %v266
    %v268 = vrot.slane %v267, 1
    %v269 = vadd.f32 %v267, %v268
    %v270 = vadd.f32 %v192, %v194
    %v271 = vrot.slane %v270, 4
    %v272 = vadd.f32 %v270, %v271
    %v273 = vrot.slane %v272, 2
    %v274 = vadd.f32 %v272, %v273
    %v275 = vrot.slane %v274, 1
    %v276 = vadd.f32 %v274, %v275
    %v277 = vadd.f32 %v195, %v197
    %v278 = vrot.slane %v277, 4
    %v279 = vadd.f32 %v277, %v278
    %v280 = vrot.slane %v279, 2
    %v281 = vadd.f32 %v279, %v280
    %v282 = vrot.slane %v281, 1
    %v283 = vadd.f32 %v281, %v282
    %v284 = vadd.f32 %v196, %v198
    %v285 = vrot.slane %v284, 4
    %v286 = vadd.f32 %v284, %v285
    %v287 = vrot.slane %v286, 2
    %v288 = vadd.f32 %v286, %v287
    %v289 = vrot.slane %v288, 1
    %v290 = vadd.f32 %v288, %v289
    %v291 = vadd.f32 %v199, %v201
    %v292 = vrot.slane %v291, 4
    %v293 = vadd.f32 %v291, %v292
    %v294 = vrot.slane %v293, 2
    %v295 = vadd.f32 %v293, %v294
    %v296 = vrot.slane %v295, 1
    %v297 = vadd.f32 %v295, %v296
    %v298 = vadd.f32 %v200, %v202
    %v299 = vrot.slane %v298, 4
    %v300 = vadd.f32 %v298, %v299
    %v301 = vrot.slane %v300, 2
    %v302 = vadd.f32 %v300, %v301
    %v303 = vrot.slane %v302, 1
    %v304 = vadd.f32 %v302, %v303
    %v305 = vadd.f32 %v203, %v205
    %v306 = vrot.slane %v305, 4
    %v307 = vadd.f32 %v305, %v306
    %v308 = vrot.slane %v307, 2
    %v309 = vadd.f32 %v307, %v308
    %v310 = vrot.slane %v309, 1
    %v311 = vadd.f32 %v309, %v310
    %v312 = vadd.f32 %v204, %v206
    %v313 = vrot.slane %v312, 4
    %v314 = vadd.f32 %v312, %v313
    %v315 = vrot.slane %v314, 2
    %v316 = vadd.f32 %v314, %v315
    %v317 = vrot.slane %v316, 1
    %v318 = vadd.f32 %v316, %v317
    %v319 = vmul.f32 %v69, 0.0625
    %v320 = vmul.f32 %v76, 0.0625
    %v321 = vmul.f32 %v83, 0.0625
    %v322 = vmul.f32 %v90, 0.0625
    %v323 = vmul.f32 %v97, 0.0625
    %v324 = vmul.f32 %v104, 0.0625
    %v325 = vmul.f32 %v111, 0.0625
    %v326 = vmul.f32 %v118, 0.0625
    %v327 = vmul.f32 %v125, 0.0625
    %v328 = vmul.f32 %v132, 0.0625
    %v329 = vmul.f32 %v139, 0.0625
    %v330 = vmul.f32 %v146, 0.0625
    %v331 = vmul.f32 %v153, 0.0625
    %v332 = vmul.f32 %v160, 0.0625
    %v333 = vmul.f32 %v167, 0.0625
    %v334 = vmul.f32 %v174, 0.0625
    %v335 = vmul.f32 %v213, 0.0625
    %v336 = vmul.f32 %v220, 0.0625
    %v337 = vmul.f32 %v227, 0.0625
    %v338 = vmul.f32 %v234, 0.0625
    %v339 = vmul.f32 %v241, 0.0625
    %v340 = vmul.f32 %v248, 0.0625
    %v341 = vmul.f32 %v255, 0.0625
    %v342 = vmul.f32 %v262, 0.0625
    %v343 = vmul.f32 %v269, 0.0625
    %v344 = vmul.f32 %v276, 0.0625
    %v345 = vmul.f32 %v283, 0.0625
    %v346 = vmul.f32 %v290, 0.0625
    %v347 = vmul.f32 %v297, 0.0625
    %v348 = vmul.f32 %v304, 0.0625
    %v349 = vmul.f32 %v311, 0.0625
    %v350 = vmul.f32 %v318, 0.0625
    %v351 = vmul.f32 %v319, %v319
    %v352 = vmul.f32 %v320, %v320
    %v353 = vmul.f32 %v321, %v321
    %v354 = vmul.f32 %v322, %v322
    %v355 = vmul.f32 %v323, %v323
    %v356 = vmul.f32 %v324, %v324
    %v357 = vmul.f32 %v325, %v325
    %v358 = vmul.f32 %v326, %v326
    %v359 = vmul.f32 %v327, %v327
    %v360 = vmul.f32 %v328, %v328
    %v361 = vmul.f32 %v329, %v329
    %v362 = vmul.f32 %v330, %v330
    %v363 = vmul.f32 %v331, %v331
    %v364 = vmul.f32 %v332, %v332
    %v365 = vmul.f32 %v333, %v333
    %v366 = vmul.f32 %v334, %v334
    %v367 = vsub.f32 %v335, %v351
    %v368 = vsub.f32 %v336, %v352
    %v369 = vsub.f32 %v337, %v353
    %v370 = vsub.f32 %v338, %v354
    %v371 = vsub.f32 %v339, %v355
    %v372 = vsub.f32 %v340, %v356
    %v373 = vsub.f32 %v341, %v357
    %v374 = vsub.f32 %v342, %v358
    %v375 = vsub.f32 %v343, %v359
    %v376 = vsub.f32 %v344, %v360
    %v377 = vsub.f32 %v345, %v361
    %v378 = vsub.f32 %v346, %v362
    %v379 = vsub.f32 %v347, %v363
    %v380 = vsub.f32 %v348, %v364
    %v381 = vsub.f32 %v349, %v365
    %v382 = vsub.f32 %v350, %v366
    %v383 = vmax.f32 %v367, 0.0
    %v384 = vmax.f32 %v368, 0.0
    %v385 = vmax.f32 %v369, 0.0
    %v386 = vmax.f32 %v370, 0.0
    %v387 = vmax.f32 %v371, 0.0
    %v388 = vmax.f32 %v372, 0.0
    %v389 = vmax.f32 %v373, 0.0
    %v390 = vmax.f32 %v374, 0.0
    %v391 = vmax.f32 %v375, 0.0
    %v392 = vmax.f32 %v376, 0.0
    %v393 = vmax.f32 %v377, 0.0
    %v394 = vmax.f32 %v378, 0.0
    %v395 = vmax.f32 %v379, 0.0
    %v396 = vmax.f32 %v380, 0.0
    %v397 = vmax.f32 %v381, 0.0
    %v398 = vmax.f32 %v382, 0.0
    %v399 = vadd.f32 %v383, 1e-05
    %v400 = vadd.f32 %v384, 1e-05
    %v401 = vadd.f32 %v385, 1e-05
    %v402 = vadd.f32 %v386, 1e-05
    %v403 = vadd.f32 %v387, 1e-05
    %v404 = vadd.f32 %v388, 1e-05
    %v405 = vadd.f32 %v389, 1e-05
    %v406 = vadd.f32 %v390, 1e-05
    %v407 = vadd.f32 %v391, 1e-05
    %v408 = vadd.f32 %v392, 1e-05
    %v409 = vadd.f32 %v393, 1e-05
    %v410 = vadd.f32 %v394, 1e-05
    %v411 = vadd.f32 %v395, 1e-05
    %v412 = vadd.f32 %v396, 1e-05
    %v413 = vadd.f32 %v397, 1e-05
    %v414 = vadd.f32 %v398, 1e-05
    %v415 = vrsqrt.pop %v399
    %v416 = vmul.f32 %v415, %v399
    %v417 = vmul.f32 %v416, %v415
    %v418 = vmul.f32 0.5, %v417
    %v419 = vsub.f32 1.5, %v418
    %v420 = vmul.f32 %v415, %v419
    %vm421 = vweird.f32 %v399
    %vm422 = vweird.f32 %v415
    %vm423 = vmor %vm421, %vm422
    %v424 = vsel %vm423, %v415, %v420
    %v425 = vrsqrt.pop %v400
    %v426 = vmul.f32 %v425, %v400
    %v427 = vmul.f32 %v426, %v425
    %v428 = vmul.f32 0.5, %v427
    %v429 = vsub.f32 1.5, %v428
    %v430 = vmul.f32 %v425, %v429
    %vm431 = vweird.f32 %v400
    %vm432 = vweird.f32 %v425
    %vm433 = vmor %vm431, %vm432
    %v434 = vsel %vm433, %v425, %v430
    %v435 = vrsqrt.pop %v401
    %v436 = vmul.f32 %v435, %v401
    %v437 = vmul.f32 %v436, %v435
    %v438 = vmul.f32 0.5, %v437
    %v439 = vsub.f32 1.5, %v438
    %v440 = vmul.f32 %v435, %v439
    %vm441 = vweird.f32 %v401
    %vm442 = vweird.f32 %v435
    %vm443 = vmor %vm441, %vm442
    %v444 = vsel %vm443, %v435, %v440
    %v445 = vrsqrt.pop %v402
    %v446 = vmul.f32 %v445, %v402
    %v447 = vmul.f32 %v446, %v445
    %v448 = vmul.f32 0.5, %v447
    %v449 = vsub.f32 1.5, %v448
    %v450 = vmul.f32 %v445, %v449
    %vm451 = vweird.f32 %v402
    %vm452 = vweird.f32 %v445
    %vm453 = vmor %vm451, %vm452
    %v454 = vsel %vm453, %v445, %v450
    %v455 = vrsqrt.pop %v403
    %v456 = vmul.f32 %v455, %v403
    %v457 = vmul.f32 %v456, %v455
    %v458 = vmul.f32 0.5, %v457
    %v459 = vsub.f32 1.5, %v458
    %v460 = vmul.f32 %v455, %v459
    %vm461 = vweird.f32 %v403
    %vm462 = vweird.f32 %v455
    %vm463 = vmor %vm461, %vm462
    %v464 = vsel %vm463, %v455, %v460
    %v465 = vrsqrt.pop %v404
    %v466 = vmul.f32 %v465, %v404
    %v467 = vmul.f32 %v466, %v465
    %v468 = vmul.f32 0.5, %v467
    %v469 = vsub.f32 1.5, %v468
    %v470 = vmul.f32 %v465, %v469
    %vm471 = vweird.f32 %v404
    %vm472 = vweird.f32 %v465
    %vm473 = vmor %vm471, %vm472
    %v474 = vsel %vm473, %v465, %v470
    %v475 = vrsqrt.pop %v405
    %v476 = vmul.f32 %v475, %v405
    %v477 = vmul.f32 %v476, %v475
    %v478 = vmul.f32 0.5, %v477
    %v479 = vsub.f32 1.5, %v478
    %v480 = vmul.f32 %v475, %v479
    %vm481 = vweird.f32 %v405
    %vm482 = vweird.f32 %v475
    %vm483 = vmor %vm481, %vm482
    %v484 = vsel %vm483, %v475, %v480
    %v485 = vrsqrt.pop %v406
    %v486 = vmul.f32 %v485, %v406
    %v487 = vmul.f32 %v486, %v485
    %v488 = vmul.f32 0.5, %v487
    %v489 = vsub.f32 1.5, %v488
    %v490 = vmul.f32 %v485, %v489
    %vm491 = vweird.f32 %v406
    %vm492 = vweird.f32 %v485
    %vm493 = vmor %vm491, %vm492
    %v494 = vsel %vm493, %v485, %v490
    %v495 = vrsqrt.pop %v407
    %v496 = vmul.f32 %v495, %v407
    %v497 = vmul.f32 %v496, %v495
    %v498 = vmul.f32 0.5, %v497
    %v499 = vsub.f32 1.5, %v498
    %v500 = vmul.f32 %v495, %v499
    %vm501 = vweird.f32 %v407
    %vm502 = vweird.f32 %v495
    %vm503 = vmor %vm501, %vm502
    %v504 = vsel %vm503, %v495, %v500
    %v505 = vrsqrt.pop %v408
    %v506 = vmul.f32 %v505, %v408
    %v507 = vmul.f32 %v506, %v505
    %v508 = vmul.f32 0.5, %v507
    %v509 = vsub.f32 1.5, %v508
    %v510 = vmul.f32 %v505, %v509
    %vm511 = vweird.f32 %v408
    %vm512 = vweird.f32 %v505
    %vm513 = vmor %vm511, %vm512
    %v514 = vsel %vm513, %v505, %v510
    %v515 = vrsqrt.pop %v409
    %v516 = vmul.f32 %v515, %v409
    %v517 = vmul.f32 %v516, %v515
    %v518 = vmul.f32 0.5, %v517
    %v519 = vsub.f32 1.5, %v518
    %v520 = vmul.f32 %v515, %v519
    %vm521 = vweird.f32 %v409
    %vm522 = vweird.f32 %v515
    %vm523 = vmor %vm521, %vm522
    %v524 = vsel %vm523, %v515, %v520
    %v525 = vrsqrt.pop %v410
    %v526 = vmul.f32 %v525, %v410
    %v527 = vmul.f32 %v526, %v525
    %v528 = vmul.f32 0.5, %v527
    %v529 = vsub.f32 1.5, %v528
    %v530 = vmul.f32 %v525, %v529
    %vm531 = vweird.f32 %v410
    %vm532 = vweird.f32 %v525
    %vm533 = vmor %vm531, %vm532
    %v534 = vsel %vm533, %v525, %v530
    %v535 = vrsqrt.pop %v411
    %v536 = vmul.f32 %v535, %v411
    %v537 = vmul.f32 %v536, %v535
    %v538 = vmul.f32 0.5, %v537
    %v539 = vsub.f32 1.5, %v538
    %v540 = vmul.f32 %v535, %v539
    %vm541 = vweird.f32 %v411
    %vm542 = vweird.f32 %v535
    %vm543 = vmor %vm541, %vm542
    %v544 = vsel %vm543, %v535, %v540
    %v545 = vrsqrt.pop %v412
    %v546 = vmul.f32 %v545, %v412
    %v547 = vmul.f32 %v546, %v545
    %v548 = vmul.f32 0.5, %v547
    %v549 = vsub.f32 1.5, %v548
    %v550 = vmul.f32 %v545, %v549
    %vm551 = vweird.f32 %v412
    %vm552 = vweird.f32 %v545
    %vm553 = vmor %vm551, %vm552
    %v554 = vsel %vm553, %v545, %v550
    %v555 = vrsqrt.pop %v413
    %v556 = vmul.f32 %v555, %v413
    %v557 = vmul.f32 %v556, %v555
    %v558 = vmul.f32 0.5, %v557
    %v559 = vsub.f32 1.5, %v558
    %v560 = vmul.f32 %v555, %v559
    %vm561 = vweird.f32 %v413
    %vm562 = vweird.f32 %v555
    %vm563 = vmor %vm561, %vm562
    %v564 = vsel %vm563, %v555, %v560
    %v565 = vrsqrt.pop %v414
    %v566 = vmul.f32 %v565, %v414
    %v567 = vmul.f32 %v566, %v565
    %v568 = vmul.f32 0.5, %v567
    %v569 = vsub.f32 1.5, %v568
    %v570 = vmul.f32 %v565, %v569
    %vm571 = vweird.f32 %v414
    %vm572 = vweird.f32 %v565
    %vm573 = vmor %vm571, %vm572
    %v574 = vsel %vm573, %v565, %v570
    %v575 = vld [vmem:[%s1] sm:$0xff]
    %v576 = vld [vmem:[%s1 + $0x8] sm:$0xff]
    %v577 = vld [vmem:[%s2] sm:$0xff]
    %v578 = vld [vmem:[%s2 + $0x8] sm:$0xff]
    %v579 = vsub.f32 %v31, %v319
    %v580 = vsub.f32 %v32, %v320
    %v581 = vsub.f32 %v33, %v319
    %v582 = vsub.f32 %v34, %v320
    %v583 = vsub.f32 %v35, %v321
    %v584 = vsub.f32 %v36, %v322
    %v585 = vsub.f32 %v37, %v321
    %v586 = vsub.f32 %v38, %v322
    %v587 = vsub.f32 %v39, %v323
    %v588 = vsub.f32 %v40, %v324
    %v589 = vsub.f32 %v41, %v323
    %v590 = vsub.f32 %v42, %v324
    %v591 = vsub.f32 %v43, %v325
    %v592 = vsub.f32 %v44, %v326
    %v593 = vsub.f32 %v45, %v325
    %v594 = vsub.f32 %v46, %v326
    %v595 = vsub.f32 %v47, %v327
    %v596 = vsub.f32 %v48, %v328
    %v597 = vsub.f32 %v49, %v327
    %v598 = vsub.f32 %v50, %v328
    %v599 = vsub.f32 %v51, %v329
    %v600 = vsub.f32 %v52, %v330
    %v601 = vsub.f32 %v53, %v329
    %v602 = vsub.f32 %v54, %v330
    %v603 = vsub.f32 %v55, %v331
    %v604 = vsub.f32 %v56, %v332
    %v605 = vsub.f32 %v57, %v331
    %v606 = vsub.f32 %v58, %v332
    %v607 = vsub.f32 %v59, %v333
    %v608 = vsub.f32 %v60, %v334
    %v609 = vsub.f32 %v61, %v333
    %v610 = vsub.f32 %v62, %v334
    %v611 = vmul.f32 %v579, %v424
    %v612 = vmul.f32 %v580, %v434
    %v613 = vmul.f32 %v581, %v424
    %v614 = vmul.f32 %v582, %v434
    %v615 = vmul.f32 %v583, %v444
    %v616 = vmul.f32 %v584, %v454
    %v617 = vmul.f32 %v585, %v444
    %v618 = vmul.f32 %v586, %v454
    %v619 = vmul.f32 %v587, %v464
    %v620 = vmul.f32 %v588, %v474
    %v621 = vmul.f32 %v589, %v464
    %v622 = vmul.f32 %v590, %v474
    %v623 = vmul.f32 %v591, %v484
    %v624 = vmul.f32 %v592, %v494
    %v625 = vmul.f32 %v593, %v484
    %v626 = vmul.f32 %v594, %v494
    %v627 = vmul.f32 %v595, %v504
    %v628 = vmul.f32 %v596, %v514
    %v629 = vmul.f32 %v597, %v504
    %v630 = vmul.f32 %v598, %v514
    %v631 = vmul.f32 %v599, %v524
    %v632 = vmul.f32 %v600, %v534
    %v633 = vmul.f32 %v601, %v524
    %v634 = vmul.f32 %v602, %v534
    %v635 = vmul.f32 %v603, %v544
    %v636 = vmul.f32 %v604, %v554
    %v637 = vmul.f32 %v605, %v544
    %v638 = vmul.f32 %v606, %v554
    %v639 = vmul.f32 %v607, %v564
    %v640 = vmul.f32 %v608, %v574
    %v641 = vmul.f32 %v609, %v564
    %v642 = vmul.f32 %v610, %v574
    %644 = vset.pattern.permute.xlu0 0
    %645 = vperm.xlu0 %644, %v575
    %v646 = vpop.permute.xlu0 %645
    %649 = vset.pattern.permute.xlu0 0
    %650 = vperm.xlu0 %649, %v576
    %v651 = vpop.permute.xlu0 %650
    %v653 = vmul.f32 %v611, %v646
    %v654 = vmul.f32 %v612, %v646
    %v655 = vmul.f32 %v613, %v651
    %v656 = vmul.f32 %v614, %v651
    %v657 = vmul.f32 %v615, %v646
    %v658 = vmul.f32 %v616, %v646
    %v659 = vmul.f32 %v617, %v651
    %v660 = vmul.f32 %v618, %v651
    %v661 = vmul.f32 %v619, %v646
    %v662 = vmul.f32 %v620, %v646
    %v663 = vmul.f32 %v621, %v651
    %v664 = vmul.f32 %v622, %v651
    %v665 = vmul.f32 %v623, %v646
    %v666 = vmul.f32 %v624, %v646
    %v667 = vmul.f32 %v625, %v651
    %v668 = vmul.f32 %v626, %v651
    %v669 = vmul.f32 %v627, %v646
    %v670 = vmul.f32 %v628, %v646
    %v671 = vmul.f32 %v629, %v651
    %v672 = vmul.f32 %v630, %v651
    %v673 = vmul.f32 %v631, %v646
    %v674 = vmul.f32 %v632, %v646
    %v675 = vmul.f32 %v633, %v651
    %v676 = vmul.f32 %v634, %v651
    %v677 = vmul.f32 %v635, %v646
    %v678 = vmul.f32 %v636, %v646
    %v679 = vmul.f32 %v637, %v651
    %v680 = vmul.f32 %v638, %v651
    %v681 = vmul.f32 %v639, %v646
    %v682 = vmul.f32 %v640, %v646
    %v683 = vmul.f32 %v641, %v651
    %v684 = vmul.f32 %v642, %v651
    %686 = vset.pattern.permute.xlu0 0
    %687 = vperm.xlu0 %686, %v577
    %v688 = vpop.permute.xlu0 %687
    %691 = vset.pattern.permute.xlu0 0
    %692 = vperm.xlu0 %691, %v578
    %v693 = vpop.permute.xlu0 %692
    %v695 = vadd.f32 %v653, %v688
    %v696 = vadd.f32 %v654, %v688
    %v697 = vadd.f32 %v655, %v693
    %v698 = vadd.f32 %v656, %v693
    %v699 = vadd.f32 %v657, %v688
    %v700 = vadd.f32 %v658, %v688
    %v701 = vadd.f32 %v659, %v693
    %v702 = vadd.f32 %v660, %v693
    %v703 = vadd.f32 %v661, %v688
    %v704 = vadd.f32 %v662, %v688
    %v705 = vadd.f32 %v663, %v693
    %v706 = vadd.f32 %v664, %v693
    %v707 = vadd.f32 %v665, %v688
    %v708 = vadd.f32 %v666, %v688
    %v709 = vadd.f32 %v667, %v693
    %v710 = vadd.f32 %v668, %v693
    %v711 = vadd.f32 %v669, %v688
    %v712 = vadd.f32 %v670, %v688
    %v713 = vadd.f32 %v671, %v693
    %v714 = vadd.f32 %v672, %v693
    %v715 = vadd.f32 %v673, %v688
    %v716 = vadd.f32 %v674, %v688
    %v717 = vadd.f32 %v675, %v693
    %v718 = vadd.f32 %v676, %v693
    %v719 = vadd.f32 %v677, %v688
    %v720 = vadd.f32 %v678, %v688
    %v721 = vadd.f32 %v679, %v693
    %v722 = vadd.f32 %v680, %v693
    %v723 = vadd.f32 %v681, %v688
    %v724 = vadd.f32 %v682, %v688
    %v725 = vadd.f32 %v683, %v693
    %v726 = vadd.f32 %v684, %v693
    %727 = vst [vmem:[#allocation5] sm:$0xff] %v695
    %728 = vst [vmem:[#allocation5 + $0x8] sm:$0xff] %v696
    %729 = vst [vmem:[#allocation5 + $0x10] sm:$0xff] %v697
    %730 = vst [vmem:[#allocation5 + $0x18] sm:$0xff] %v698
    %731 = vst [vmem:[#allocation5 + $0x20] sm:$0xff] %v699
    %732 = vst [vmem:[#allocation5 + $0x28] sm:$0xff] %v700
    %733 = vst [vmem:[#allocation5 + $0x30] sm:$0xff] %v701
    %734 = vst [vmem:[#allocation5 + $0x38] sm:$0xff] %v702
    %735 = vst [vmem:[#allocation5 + $0x40] sm:$0xff] %v703
    %736 = vst [vmem:[#allocation5 + $0x48] sm:$0xff] %v704
    %737 = vst [vmem:[#allocation5 + $0x50] sm:$0xff] %v705
    %738 = vst [vmem:[#allocation5 + $0x58] sm:$0xff] %v706
    %739 = vst [vmem:[#allocation5 + $0x60] sm:$0xff] %v707
    %740 = vst [vmem:[#allocation5 + $0x68] sm:$0xff] %v708
    %741 = vst [vmem:[#allocation5 + $0x70] sm:$0xff] %v709
    %742 = vst [vmem:[#allocation5 + $0x78] sm:$0xff] %v710
    %743 = vst [vmem:[#allocation5 + $0x80] sm:$0xff] %v711
    %744 = vst [vmem:[#allocation5 + $0x88] sm:$0xff] %v712
    %745 = vst [vmem:[#allocation5 + $0x90] sm:$0xff] %v713
    %746 = vst [vmem:[#allocation5 + $0x98] sm:$0xff] %v714
    %747 = vst [vmem:[#allocation5 + $0xa0] sm:$0xff] %v715
    %748 = vst [vmem:[#allocation5 + $0xa8] sm:$0xff] %v716
    %749 = vst [vmem:[#allocation5 + $0xb0] sm:$0xff] %v717
    %750 = vst [vmem:[#allocation5 + $0xb8] sm:$0xff] %v718
    %751 = vst [vmem:[#allocation5 + $0xc0] sm:$0xff] %v719
    %752 = vst [vmem:[#allocation5 + $0xc8] sm:$0xff] %v720
    %753 = vst [vmem:[#allocation5 + $0xd0] sm:$0xff] %v721
    %754 = vst [vmem:[#allocation5 + $0xd8] sm:$0xff] %v722
    %755 = vst [vmem:[#allocation5 + $0xe0] sm:$0xff] %v723
    %756 = vst [vmem:[#allocation5 + $0xe8] sm:$0xff] %v724
    %757 = vst [vmem:[#allocation5 + $0xf0] sm:$0xff] %v725
    %758 = vst [vmem:[#allocation5 + $0xf8] sm:$0xff] %v726
    // Predicated region
    $region18: #{tpu_custom_call.1} parent=1 // pred_check
      _
    $region19: #{tpu_custom_call.1} parent=1 // pred_check_branch
      %760 = sbr.rel (0) target = $region21
    $region20: #{tpu_custom_call.1} parent=1 // pred_region
      %762 = vsyncadd [#allocation4], 0
      %s763 = sshll.u32 [#allocation5], 4
      %s764 = int_to_ptr.vmem [resolvable:$true] %s763
      %s765 = sshll.u32 %s3, 4
      %s766 = int_to_ptr.hbm [resolvable:$true] %s765
      %771 = dma.vmem_to_hbm [thread:$0]  %s764, 4096, %s766, [#allocation4], 256, 256, 16
    $region21: #{tpu_custom_call.1} parent=1 // pred_fallthru
      _
    // Predicated region
    $region22: #{tpu_custom_call.1} parent=1 // pred_check
      _
    $region23: #{tpu_custom_call.1} parent=1 // pred_check_branch
      %773 = sbr.rel (0) target = $region25
    $region24: #{tpu_custom_call.1} parent=1 // pred_region
      %775 = dma.done [#allocation4], 4096
    $region25: #{tpu_custom_call.1} parent=1 // pred_fallthru
      _
    %776 = vsyncpa [#allocation3], 1
    %777 = vsyncpa [#allocation4], 1

</llo_original>
